<compile_context>
chip_gen: v5e
topology: v5e:2x2
jax: 0.10.0
libtpu: 0.0.40
codegen_flags: <defaults>
</compile_context>

<pallas_src>
import jax
import jax.numpy as jnp
from jax.experimental import pallas as pl
from jax.experimental.pallas import tpu as pltpu

EPS = 1e-8
_LANES = 128
_TILE_BYTES = 2 * 1024 * 1024     # per-operand tile budget (buffers + f32 temps stay << limit)
_VMEM_LIMIT = 32 * 1024 * 1024    # scoped VMEM limit; safe on v5e/v6e/v7x
_MIN_GRID_STEPS = 8               # keep >= 8 grid steps so v7x megacore can shard the grid


def _round_up(x, m):
    return ((x + m - 1) // m) * m


def _sublane_align(dtype):
    # (8,128) native tiling for 32-bit dtypes, (16,128) for 16-bit, (32,128) for 8-bit.
    itemsize = jnp.dtype(dtype).itemsize
    return 8 * max(1, 4 // itemsize)


def _pick_block_rows(n_rows, row_width, dtype):
    """Row-tile size: sublane aligned, within the VMEM tile budget, >= _MIN_GRID_STEPS steps."""
    align = _sublane_align(dtype)
    if n_rows <= align:
        # block equals the full array dim (legal even when < sublane alignment)
        return n_rows
    row_bytes = row_width * jnp.dtype(dtype).itemsize
    budget = (_TILE_BYTES // max(1, row_bytes)) // align * align
    budget = max(align, budget)
    target = _round_up(pl.cdiv(n_rows, _MIN_GRID_STEPS), align)
    return max(align, min(budget, target))


def _rows_kernel(x_ref, o_ref):
    """General path: one normalization group per row (D >= 128 or D not dividing 128)."""
    x = x_ref[...].astype(jnp.float32)
    ss = jnp.sum(x * x, axis=-1, keepdims=True)        # (tm, 1) lane reduction (XLU)
    inv = 1.0 / (jnp.sqrt(ss) + EPS)                    # exact; one reciprocal per row
    o_ref[...] = (x * inv).astype(o_ref.dtype)


def _packed_kernel(x_ref, bd_ref, o_ref):
    """Lane-dense path: each 128-lane row packs 128/D groups of width D.

    The segmented sum-of-squares is one MXU matmul against a constant
    block-diagonal ones matrix; the group sum is already broadcast to every
    lane of its group, so a single full-lane rsqrt-style pass finishes the job.
    """
    x = x_ref[...].astype(jnp.float32)
    ss = jnp.dot(x * x, bd_ref[...],
                 preferred_element_type=jnp.float32,
                 precision=jax.lax.Precision.HIGHEST)   # ~f32-exact segmented sum on idle MXU
    inv = 1.0 / (jnp.sqrt(ss) + EPS)
    o_ref[...] = (x * inv).astype(o_ref.dtype)


def _launch(kernel, inputs, in_specs, n_rows, n_cols, block_rows, dtype):
    grid = (pl.cdiv(n_rows, block_rows),)               # ragged last block handled by Pallas
    return pl.pallas_call(
        kernel,
        out_shape=jax.ShapeDtypeStruct((n_rows, n_cols), dtype),
        grid_spec=pltpu.PrefetchScalarGridSpec(
            num_scalar_prefetch=0,
            grid=grid,
            in_specs=in_specs,
            out_specs=pl.BlockSpec((block_rows, n_cols), lambda i: (i, 0)),
        ),
        compiler_params=pltpu.CompilerParams(
            dimension_semantics=("parallel",),           # v7x: shard row grid across 2 TCs
            vmem_limit_bytes=_VMEM_LIMIT,
        ),
    )(*inputs)


def _block_diag_ones(dim):
    """128x128 matrix with B[i,j] = 1 iff i//dim == j//dim (constant, built once per trace)."""
    lane = jnp.arange(_LANES)
    return ((lane[:, None] // dim) == (lane[None, :] // dim)).astype(jnp.float32)


def l2norm_pallas(x):
    """L2-normalize x along its last dimension using a Pallas TPU kernel."""
    orig_shape = x.shape
    D = orig_shape[-1]
    x2d = x.reshape(-1, D)
    M = x2d.shape[0]

    if D < _LANES and _LANES % D == 0:
        # ---- lane-dense packed path for narrow D (any divisor of 128) ----
        r = _LANES // D                       # groups packed per 128-lane row
        pad_rows = (-M) % r                   # tiny pad (< r <= 128 rows) only if needed
        if pad_rows:
            x2d = jnp.pad(x2d, ((0, pad_rows), (0, 0)))   # zero rows -> output 0, sliced off
        Mp = (M + pad_rows) // r
        xp = x2d.reshape(Mp, _LANES)          # free reshape (row-major contiguous)
        bd = _block_diag_ones(D)
        block_rows = _pick_block_rows(Mp, _LANES, x.dtype)
        outp = _launch(
            _packed_kernel,
            (xp, bd),
            [pl.BlockSpec((block_rows, _LANES), lambda i: (i, 0)),
             pl.BlockSpec((_LANES, _LANES), lambda i: (0, 0))],   # resident, fetched once
            Mp, _LANES, block_rows, x.dtype)
        out2d = outp.reshape(Mp * r, D)
        if pad_rows:
            out2d = out2d[:M]
    else:
        # ---- general per-row path (D >= 128 or D not dividing 128) ----
        # TODO(synk): narrow D that does not divide 128 (e.g. 24, 48, 96) could also be
        # lane-packed with a few dead lanes; it currently uses masked partial stores.
        block_rows = _pick_block_rows(M, D, x.dtype)
        out2d = _launch(
            _rows_kernel,
            (x2d,),
            [pl.BlockSpec((block_rows, D), lambda i: (i, 0))],
            M, D, block_rows, x.dtype)

    return out2d.reshape(orig_shape)


class L2Module:
    """Drop-in equivalent of the PyTorch L2Module forward."""

    def __call__(self, x):
        return l2norm_pallas(x)


def l2norm_ref(x):
    # pure-JAX reference mirroring the torch implementation exactly
    norm = jnp.sqrt(jnp.sum(x.astype(jnp.float32) ** 2, axis=-1, keepdims=True)) + EPS
    return (x / norm).astype(x.dtype)


if __name__ == "__main__":
    key = jax.random.PRNGKey(0)
    k1, k2, k3 = jax.random.split(key, 3)
    module = L2Module()

    # (batch, seq, hidden) as implied by the MANME forward -> packed (narrow-D) path
    x = jax.random.normal(k1, (2, 8, 32), dtype=jnp.float32)
    out = jax.block_until_ready(module(x))
    ref = l2norm_ref(x)
    assert out.shape == x.shape and out.dtype == x.dtype
    assert jnp.allclose(out, ref, atol=1e-5, rtol=1e-5), "mismatch vs reference (packed path)"

    # wide-D general path, multi-step grid with a ragged-free edge
    x_wide = jax.random.normal(k2, (2, 8, 256), dtype=jnp.float32)
    out_wide = jax.block_until_ready(module(x_wide))
    assert jnp.allclose(out_wide, l2norm_ref(x_wide), atol=1e-5, rtol=1e-5), \
        "mismatch vs reference (rows path)"

    # row count not divisible by the pack factor -> exercises the minimal-pad branch
    x_rag = jax.random.normal(k3, (3, 7, 32), dtype=jnp.float32)
    out_rag = jax.block_until_ready(module(x_rag))
    assert jnp.allclose(out_rag, l2norm_ref(x_rag), atol=1e-5, rtol=1e-5), \
        "mismatch vs reference (ragged packed path)"

    print("KERNEL_OK")
</pallas_src>

<mosaic_0001>
module attributes {stable_mosaic.version = 11 : i64} {
  func.func @_packed_kernel(%arg0: i32, %arg1: memref<4x128xf32, #tpu.memory_space<vmem>>, %arg2: memref<128x128xf32, #tpu.memory_space<vmem>>, %arg3: memref<4x128xf32, #tpu.memory_space<vmem>>) attributes {dimension_semantics = [#tpu.dimension_semantics<parallel>], iteration_bounds = array<i64: 1>, scalar_prefetch = 0 : i64, scratch_operands = 0 : i64, tpu.core_type = #tpu.core_type<tc>, window_params = [{transform_indices = @transform_0, window_bounds = array<i64: 4, 128>}, {pipeline_mode = #tpu.pipeline_mode<synchronous>, transform_indices = @transform_1, window_bounds = array<i64: 128, 128>}, {transform_indices = @transform_2, window_bounds = array<i64: 4, 128>}]} {
    %c0 = arith.constant 0 : index
    %c0_0 = arith.constant 0 : index
    %0 = vector.load %arg1[%c0, %c0_0] : memref<4x128xf32, #tpu.memory_space<vmem>>, vector<4x128xf32>
    %1 = arith.mulf %0, %0 : vector<4x128xf32>
    %c0_1 = arith.constant 0 : index
    %c0_2 = arith.constant 0 : index
    %2 = vector.load %arg2[%c0_1, %c0_2] : memref<128x128xf32, #tpu.memory_space<vmem>>, vector<128x128xf32>
    %cst = arith.constant dense<0.000000e+00> : vector<4x128xf32>
    %3 = tpu.matmul %1, %2, %cst {dimension_numbers = #tpu.dot_dimension_numbers<[1], [0], [0], [1], [0, 0, 1, 1], [], []>, precision = #tpu.contract_precision<fp32>} : vector<4x128xf32>, vector<128x128xf32>, vector<4x128xf32> -> vector<4x128xf32>
    %4 = math.sqrt %3 : vector<4x128xf32>
    %cst_3 = arith.constant 9.99999993E-9 : f32
    %5 = vector.broadcast %cst_3 : f32 to vector<4x128xf32>
    %6 = arith.addf %4, %5 : vector<4x128xf32>
    %cst_4 = arith.constant 1.000000e+00 : f32
    %7 = vector.broadcast %cst_4 : f32 to vector<4x128xf32>
    %8 = arith.divf %7, %6 : vector<4x128xf32>
    %9 = arith.mulf %0, %8 : vector<4x128xf32>
    %c0_5 = arith.constant 0 : index
    %c0_6 = arith.constant 0 : index
    %10 = vector.load %arg3[%c0_5, %c0_6] : memref<4x128xf32, #tpu.memory_space<vmem>>, vector<4x128xf32>
    tpu.vector_store %arg3[%c0_5, %c0_6], %9 {strides = array<i32>} : memref<4x128xf32, #tpu.memory_space<vmem>>, vector<4x128xf32>,
    return
  }
  func.func @transform_0(%arg0: i32) -> (i32, i32) {
    %c0_i32 = arith.constant 0 : i32
    %c0_i32_0 = arith.constant 0 : i32
    return %arg0, %c0_i32 : i32, i32
  }
  func.func @transform_1(%arg0: i32) -> (i32, i32) {
    %c0_i32 = arith.constant 0 : i32
    %c0_i32_0 = arith.constant 0 : i32
    %c0_i32_1 = arith.constant 0 : i32
    return %c0_i32, %c0_i32_0 : i32, i32
  }
  func.func @transform_2(%arg0: i32) -> (i32, i32) {
    %c0_i32 = arith.constant 0 : i32
    %c0_i32_0 = arith.constant 0 : i32
    return %arg0, %c0_i32 : i32, i32
  }
}

</mosaic_0001>

<llo_original>
// kernel: tpu_custom_call.1
$region0: #{tpu_custom_call.1}
  #allocation0 [shape = 'u32[]', space=smem, size = 0x4, offset = 0x4, fixed_abs, tag = 'smem constant byte address 0x4 - core index']
  #allocation1 [shape = 'u32[72,128]{1,0:T(1,128)}', space=vmem, size = 0x9000, scoped, tag = 'internal scratch']
  %s0 = inlined_call_operand.hbm [shape: f32[4,128], index: 0, kind: input, shape index: {}]
  %s1 = inlined_call_operand.hbm [shape: f32[128,128], index: 1, kind: input, shape index: {}]
  %s2 = inlined_call_operand.hbm [shape: f32[4,128], index: 2, kind: output, shape index: {}]
  %s3 = sld [smem:[#allocation0]]
  $region26: #{tpu_custom_call.1} parent=0
    _
  %s5 = ssub.s32 1, %s3
  %s6 = scalar_select 0, %s5, %s3
  $region1: #{tpu_custom_call.1} parent=0
    #allocation2 [shape = 'u8[2048]{0}', space=vmem, size = 0x800, scoped, tag = 'input window, operand 0, single buffered']
    #allocation3 [shape = 's32[1]{0}', space=sflag, size = 0x4, scoped, tag = 'scoped memory for tpu_custom_call.1']
    #allocation4 [shape = 's32[1]{0}', space=sflag, size = 0x4, scoped, tag = 'scoped memory for tpu_custom_call.1']
    #allocation5 [shape = 'u8[65536]{0}', space=vmem, size = 0x10000, scoped, tag = 'input window, operand 1, single buffered']
    #allocation6 [shape = 's32[1]{0}', space=sflag, size = 0x4, scoped, tag = 'scoped memory for tpu_custom_call.1']
    #allocation7 [shape = 'u8[2048]{0}', space=vmem, size = 0x800, scoped, tag = 'output window, operand 0, single buffered']
    %7 = vsyncpa [#allocation3], 0
    %8 = vsyncpa [#allocation6], 0
    %9 = vsyncpa [#allocation4], 0
    // Predicated region
    $region2: #{tpu_custom_call.1} parent=1 // pred_check
      _
    $region3: #{tpu_custom_call.1} parent=1 // pred_check_branch
      %11 = sbr.rel (0) target = $region5
    $region4: #{tpu_custom_call.1} parent=1 // pred_region
      %13 = vsyncadd [#allocation3], 0
      %s15 = sshll.u32 %s0, 4
      %s16 = int_to_ptr.hbm [resolvable:$true] %s15
      %s17 = sshll.u32 [#allocation2], 4
      %s18 = int_to_ptr.vmem [resolvable:$true] %s17
      %20 = dma.hbm_to_vmem [thread:$0]  %s16, 64, %s18, [#allocation3]
    $region5: #{tpu_custom_call.1} parent=1 // pred_fallthru
      _
    // Predicated region
    $region6: #{tpu_custom_call.1} parent=1 // pred_check
      _
    $region7: #{tpu_custom_call.1} parent=1 // pred_check_branch
      %22 = sbr.rel (0) target = $region9
    $region8: #{tpu_custom_call.1} parent=1 // pred_region
      %24 = vsyncadd [#allocation6], 0
      %s25 = sshll.u32 %s1, 4
      %s26 = int_to_ptr.hbm [resolvable:$true] %s25
      %s27 = sshll.u32 [#allocation5], 4
      %s28 = int_to_ptr.vmem [resolvable:$true] %s27
      %33 = dma.hbm_to_vmem [thread:$0]  %s26, 2048, %s28, [#allocation6], 128, 128, 8
    $region9: #{tpu_custom_call.1} parent=1 // pred_fallthru
      _
    // Predicated region
    $region10: #{tpu_custom_call.1} parent=1 // pred_check
      _
    $region11: #{tpu_custom_call.1} parent=1 // pred_check_branch
      %35 = sbr.rel (0) target = $region13
    $region12: #{tpu_custom_call.1} parent=1 // pred_region
      %37 = dma.done [#allocation3], 64
    $region13: #{tpu_custom_call.1} parent=1 // pred_fallthru
      _
    // Predicated region
    $region14: #{tpu_custom_call.1} parent=1 // pred_check
      _
    $region15: #{tpu_custom_call.1} parent=1 // pred_check_branch
      %39 = sbr.rel (0) target = $region17
    $region16: #{tpu_custom_call.1} parent=1 // pred_region
      %41 = dma.done [#allocation6], 2048
    $region17: #{tpu_custom_call.1} parent=1 // pred_fallthru
      _
    %v42 = vld [vmem:[#allocation2] sm:$0xf]
    %v43 = vmul.f32 %v42, %v42
    %v44 = vld [vmem:[#allocation5] sm:$0xff]
    %v45 = vld [vmem:[#allocation5 + $0x8] sm:$0xff]
    %v46 = vld [vmem:[#allocation5 + $0x10] sm:$0xff]
    %v47 = vld [vmem:[#allocation5 + $0x18] sm:$0xff]
    %v48 = vld [vmem:[#allocation5 + $0x20] sm:$0xff]
    %v49 = vld [vmem:[#allocation5 + $0x28] sm:$0xff]
    %v50 = vld [vmem:[#allocation5 + $0x30] sm:$0xff]
    %v51 = vld [vmem:[#allocation5 + $0x38] sm:$0xff]
    %v52 = vld [vmem:[#allocation5 + $0x40] sm:$0xff]
    %v53 = vld [vmem:[#allocation5 + $0x48] sm:$0xff]
    %v54 = vld [vmem:[#allocation5 + $0x50] sm:$0xff]
    %v55 = vld [vmem:[#allocation5 + $0x58] sm:$0xff]
    %v56 = vld [vmem:[#allocation5 + $0x60] sm:$0xff]
    %v57 = vld [vmem:[#allocation5 + $0x68] sm:$0xff]
    %v58 = vld [vmem:[#allocation5 + $0x70] sm:$0xff]
    %v59 = vld [vmem:[#allocation5 + $0x78] sm:$0xff]
    %v60 = vand.u32 %v59, 4294901760
    %61 = vmatpush.msra.mxu0 %v60
    %v62 = vand.u32 %v58, 4294901760
    %63 = vmatpush.msra.mxu0 %v62
    %v64 = vand.u32 %v57, 4294901760
    %65 = vmatpush.msra.mxu0 %v64
    %v66 = vand.u32 %v56, 4294901760
    %67 = vmatpush.msra.mxu0 %v66
    %v68 = vand.u32 %v55, 4294901760
    %69 = vmatpush.msra.mxu0 %v68
    %v70 = vand.u32 %v54, 4294901760
    %71 = vmatpush.msra.mxu0 %v70
    %v72 = vand.u32 %v53, 4294901760
    %73 = vmatpush.msra.mxu0 %v72
    %v74 = vand.u32 %v52, 4294901760
    %75 = vmatpush.msra.mxu0 %v74
    %v76 = vand.u32 %v51, 4294901760
    %77 = vmatpush.msra.mxu0 %v76
    %v78 = vand.u32 %v50, 4294901760
    %79 = vmatpush.msra.mxu0 %v78
    %v80 = vand.u32 %v49, 4294901760
    %81 = vmatpush.msra.mxu0 %v80
    %v82 = vand.u32 %v48, 4294901760
    %83 = vmatpush.msra.mxu0 %v82
    %v84 = vand.u32 %v47, 4294901760
    %85 = vmatpush.msra.mxu0 %v84
    %v86 = vand.u32 %v46, 4294901760
    %87 = vmatpush.msra.mxu0 %v86
    %v88 = vand.u32 %v45, 4294901760
    %89 = vmatpush.msra.mxu0 %v88
    %v90 = vand.u32 %v44, 4294901760
    %91 = vmatpush.msra.mxu0 %v90
    %v92 = vand.u32 %v43, 4294901760
    %v93 = vsub.f32 %v43, %v92
    %v94 = vand.u32 %v93, 4294901760
    %v95 = vsub.f32 %v93, %v94
    %v96 = vand.u32 %v95, 4294901760
    %97 = vmatmul.f32.gmra.mxu0 %v96
    %v98 = vpop.f32.mrf.mxu0
    %v99 = vadd.f32 0.0, %v98
    %100 = vdwg.mxu0
    %v101 = vand.u32 %v59, 4294901760
    %v102 = vsub.f32 %v59, %v101
    %v103 = vand.u32 %v102, 4294901760
    %v104 = vsub.f32 %v102, %v103
    %v105 = vand.u32 %v104, 4294901760
    %106 = vmatpush.msra.mxu0 %v105
    %v107 = vand.u32 %v58, 4294901760
    %v108 = vsub.f32 %v58, %v107
    %v109 = vand.u32 %v108, 4294901760
    %v110 = vsub.f32 %v108, %v109
    %v111 = vand.u32 %v110, 4294901760
    %112 = vmatpush.msra.mxu0 %v111
    %v113 = vand.u32 %v57, 4294901760
    %v114 = vsub.f32 %v57, %v113
    %v115 = vand.u32 %v114, 4294901760
    %v116 = vsub.f32 %v114, %v115
    %v117 = vand.u32 %v116, 4294901760
    %118 = vmatpush.msra.mxu0 %v117
    %v119 = vand.u32 %v56, 4294901760
    %v120 = vsub.f32 %v56, %v119
    %v121 = vand.u32 %v120, 4294901760
    %v122 = vsub.f32 %v120, %v121
    %v123 = vand.u32 %v122, 4294901760
    %124 = vmatpush.msra.mxu0 %v123
    %v125 = vand.u32 %v55, 4294901760
    %v126 = vsub.f32 %v55, %v125
    %v127 = vand.u32 %v126, 4294901760
    %v128 = vsub.f32 %v126, %v127
    %v129 = vand.u32 %v128, 4294901760
    %130 = vmatpush.msra.mxu0 %v129
    %v131 = vand.u32 %v54, 4294901760
    %v132 = vsub.f32 %v54, %v131
    %v133 = vand.u32 %v132, 4294901760
    %v134 = vsub.f32 %v132, %v133
    %v135 = vand.u32 %v134, 4294901760
    %136 = vmatpush.msra.mxu0 %v135
    %v137 = vand.u32 %v53, 4294901760
    %v138 = vsub.f32 %v53, %v137
    %v139 = vand.u32 %v138, 4294901760
    %v140 = vsub.f32 %v138, %v139
    %v141 = vand.u32 %v140, 4294901760
    %142 = vmatpush.msra.mxu0 %v141
    %v143 = vand.u32 %v52, 4294901760
    %v144 = vsub.f32 %v52, %v143
    %v145 = vand.u32 %v144, 4294901760
    %v146 = vsub.f32 %v144, %v145
    %v147 = vand.u32 %v146, 4294901760
    %148 = vmatpush.msra.mxu0 %v147
    %v149 = vand.u32 %v51, 4294901760
    %v150 = vsub.f32 %v51, %v149
    %v151 = vand.u32 %v150, 4294901760
    %v152 = vsub.f32 %v150, %v151
    %v153 = vand.u32 %v152, 4294901760
    %154 = vmatpush.msra.mxu0 %v153
    %v155 = vand.u32 %v50, 4294901760
    %v156 = vsub.f32 %v50, %v155
    %v157 = vand.u32 %v156, 4294901760
    %v158 = vsub.f32 %v156, %v157
    %v159 = vand.u32 %v158, 4294901760
    %160 = vmatpush.msra.mxu0 %v159
    %v161 = vand.u32 %v49, 4294901760
    %v162 = vsub.f32 %v49, %v161
    %v163 = vand.u32 %v162, 4294901760
    %v164 = vsub.f32 %v162, %v163
    %v165 = vand.u32 %v164, 4294901760
    %166 = vmatpush.msra.mxu0 %v165
    %v167 = vand.u32 %v48, 4294901760
    %v168 = vsub.f32 %v48, %v167
    %v169 = vand.u32 %v168, 4294901760
    %v170 = vsub.f32 %v168, %v169
    %v171 = vand.u32 %v170, 4294901760
    %172 = vmatpush.msra.mxu0 %v171
    %v173 = vand.u32 %v47, 4294901760
    %v174 = vsub.f32 %v47, %v173
    %v175 = vand.u32 %v174, 4294901760
    %v176 = vsub.f32 %v174, %v175
    %v177 = vand.u32 %v176, 4294901760
    %178 = vmatpush.msra.mxu0 %v177
    %v179 = vand.u32 %v46, 4294901760
    %v180 = vsub.f32 %v46, %v179
    %v181 = vand.u32 %v180, 4294901760
    %v182 = vsub.f32 %v180, %v181
    %v183 = vand.u32 %v182, 4294901760
    %184 = vmatpush.msra.mxu0 %v183
    %v185 = vand.u32 %v45, 4294901760
    %v186 = vsub.f32 %v45, %v185
    %v187 = vand.u32 %v186, 4294901760
    %v188 = vsub.f32 %v186, %v187
    %v189 = vand.u32 %v188, 4294901760
    %190 = vmatpush.msra.mxu0 %v189
    %v191 = vand.u32 %v44, 4294901760
    %v192 = vsub.f32 %v44, %v191
    %v193 = vand.u32 %v192, 4294901760
    %v194 = vsub.f32 %v192, %v193
    %v195 = vand.u32 %v194, 4294901760
    %196 = vmatpush.msra.mxu0 %v195
    %v197 = vand.u32 %v43, 4294901760
    %198 = vmatmul.f32.gmra.mxu0 %v197
    %v199 = vpop.f32.mrf.mxu0
    %v200 = vadd.f32 %v99, %v199
    %201 = vdwg.mxu0
    %v202 = vand.u32 %v59, 4294901760
    %v203 = vsub.f32 %v59, %v202
    %204 = vmatpush.msra.mxu0 %v203
    %v205 = vand.u32 %v58, 4294901760
    %v206 = vsub.f32 %v58, %v205
    %207 = vmatpush.msra.mxu0 %v206
    %v208 = vand.u32 %v57, 4294901760
    %v209 = vsub.f32 %v57, %v208
    %210 = vmatpush.msra.mxu0 %v209
    %v211 = vand.u32 %v56, 4294901760
    %v212 = vsub.f32 %v56, %v211
    %213 = vmatpush.msra.mxu0 %v212
    %v214 = vand.u32 %v55, 4294901760
    %v215 = vsub.f32 %v55, %v214
    %216 = vmatpush.msra.mxu0 %v215
    %v217 = vand.u32 %v54, 4294901760
    %v218 = vsub.f32 %v54, %v217
    %219 = vmatpush.msra.mxu0 %v218
    %v220 = vand.u32 %v53, 4294901760
    %v221 = vsub.f32 %v53, %v220
    %222 = vmatpush.msra.mxu0 %v221
    %v223 = vand.u32 %v52, 4294901760
    %v224 = vsub.f32 %v52, %v223
    %225 = vmatpush.msra.mxu0 %v224
    %v226 = vand.u32 %v51, 4294901760
    %v227 = vsub.f32 %v51, %v226
    %228 = vmatpush.msra.mxu0 %v227
    %v229 = vand.u32 %v50, 4294901760
    %v230 = vsub.f32 %v50, %v229
    %231 = vmatpush.msra.mxu0 %v230
    %v232 = vand.u32 %v49, 4294901760
    %v233 = vsub.f32 %v49, %v232
    %234 = vmatpush.msra.mxu0 %v233
    %v235 = vand.u32 %v48, 4294901760
    %v236 = vsub.f32 %v48, %v235
    %237 = vmatpush.msra.mxu0 %v236
    %v238 = vand.u32 %v47, 4294901760
    %v239 = vsub.f32 %v47, %v238
    %240 = vmatpush.msra.mxu0 %v239
    %v241 = vand.u32 %v46, 4294901760
    %v242 = vsub.f32 %v46, %v241
    %243 = vmatpush.msra.mxu0 %v242
    %v244 = vand.u32 %v45, 4294901760
    %v245 = vsub.f32 %v45, %v244
    %246 = vmatpush.msra.mxu0 %v245
    %v247 = vand.u32 %v44, 4294901760
    %v248 = vsub.f32 %v44, %v247
    %249 = vmatpush.msra.mxu0 %v248
    %v250 = vand.u32 %v43, 4294901760
    %v251 = vsub.f32 %v43, %v250
    %252 = vmatmul.f32.gmra.mxu0 %v251
    %v253 = vpop.f32.mrf.mxu0
    %v254 = vadd.f32 %v200, %v253
    %255 = vdwg.mxu0
    %v256 = vand.u32 %v59, 4294901760
    %257 = vmatpush.msra.mxu0 %v256
    %v258 = vand.u32 %v58, 4294901760
    %259 = vmatpush.msra.mxu0 %v258
    %v260 = vand.u32 %v57, 4294901760
    %261 = vmatpush.msra.mxu0 %v260
    %v262 = vand.u32 %v56, 4294901760
    %263 = vmatpush.msra.mxu0 %v262
    %v264 = vand.u32 %v55, 4294901760
    %265 = vmatpush.msra.mxu0 %v264
    %v266 = vand.u32 %v54, 4294901760
    %267 = vmatpush.msra.mxu0 %v266
    %v268 = vand.u32 %v53, 4294901760
    %269 = vmatpush.msra.mxu0 %v268
    %v270 = vand.u32 %v52, 4294901760
    %271 = vmatpush.msra.mxu0 %v270
    %v272 = vand.u32 %v51, 4294901760
    %273 = vmatpush.msra.mxu0 %v272
    %v274 = vand.u32 %v50, 4294901760
    %275 = vmatpush.msra.mxu0 %v274
    %v276 = vand.u32 %v49, 4294901760
    %277 = vmatpush.msra.mxu0 %v276
    %v278 = vand.u32 %v48, 4294901760
    %279 = vmatpush.msra.mxu0 %v278
    %v280 = vand.u32 %v47, 4294901760
    %281 = vmatpush.msra.mxu0 %v280
    %v282 = vand.u32 %v46, 4294901760
    %283 = vmatpush.msra.mxu0 %v282
    %v284 = vand.u32 %v45, 4294901760
    %285 = vmatpush.msra.mxu0 %v284
    %v286 = vand.u32 %v44, 4294901760
    %287 = vmatpush.msra.mxu0 %v286
    %v288 = vand.u32 %v43, 4294901760
    %v289 = vsub.f32 %v43, %v288
    %v290 = vand.u32 %v289, 4294901760
    %291 = vmatmul.f32.gmra.mxu0 %v290
    %v292 = vpop.f32.mrf.mxu0
    %v293 = vadd.f32 %v254, %v292
    %294 = vdwg.mxu0
    %v295 = vand.u32 %v59, 4294901760
    %v296 = vsub.f32 %v59, %v295
    %v297 = vand.u32 %v296, 4294901760
    %298 = vmatpush.msra.mxu0 %v297
    %v299 = vand.u32 %v58, 4294901760
    %v300 = vsub.f32 %v58, %v299
    %v301 = vand.u32 %v300, 4294901760
    %302 = vmatpush.msra.mxu0 %v301
    %v303 = vand.u32 %v57, 4294901760
    %v304 = vsub.f32 %v57, %v303
    %v305 = vand.u32 %v304, 4294901760
    %306 = vmatpush.msra.mxu0 %v305
    %v307 = vand.u32 %v56, 4294901760
    %v308 = vsub.f32 %v56, %v307
    %v309 = vand.u32 %v308, 4294901760
    %310 = vmatpush.msra.mxu0 %v309
    %v311 = vand.u32 %v55, 4294901760
    %v312 = vsub.f32 %v55, %v311
    %v313 = vand.u32 %v312, 4294901760
    %314 = vmatpush.msra.mxu0 %v313
    %v315 = vand.u32 %v54, 4294901760
    %v316 = vsub.f32 %v54, %v315
    %v317 = vand.u32 %v316, 4294901760
    %318 = vmatpush.msra.mxu0 %v317
    %v319 = vand.u32 %v53, 4294901760
    %v320 = vsub.f32 %v53, %v319
    %v321 = vand.u32 %v320, 4294901760
    %322 = vmatpush.msra.mxu0 %v321
    %v323 = vand.u32 %v52, 4294901760
    %v324 = vsub.f32 %v52, %v323
    %v325 = vand.u32 %v324, 4294901760
    %326 = vmatpush.msra.mxu0 %v325
    %v327 = vand.u32 %v51, 4294901760
    %v328 = vsub.f32 %v51, %v327
    %v329 = vand.u32 %v328, 4294901760
    %330 = vmatpush.msra.mxu0 %v329
    %v331 = vand.u32 %v50, 4294901760
    %v332 = vsub.f32 %v50, %v331
    %v333 = vand.u32 %v332, 4294901760
    %334 = vmatpush.msra.mxu0 %v333
    %v335 = vand.u32 %v49, 4294901760
    %v336 = vsub.f32 %v49, %v335
    %v337 = vand.u32 %v336, 4294901760
    %338 = vmatpush.msra.mxu0 %v337
    %v339 = vand.u32 %v48, 4294901760
    %v340 = vsub.f32 %v48, %v339
    %v341 = vand.u32 %v340, 4294901760
    %342 = vmatpush.msra.mxu0 %v341
    %v343 = vand.u32 %v47, 4294901760
    %v344 = vsub.f32 %v47, %v343
    %v345 = vand.u32 %v344, 4294901760
    %346 = vmatpush.msra.mxu0 %v345
    %v347 = vand.u32 %v46, 4294901760
    %v348 = vsub.f32 %v46, %v347
    %v349 = vand.u32 %v348, 4294901760
    %350 = vmatpush.msra.mxu0 %v349
    %v351 = vand.u32 %v45, 4294901760
    %v352 = vsub.f32 %v45, %v351
    %v353 = vand.u32 %v352, 4294901760
    %354 = vmatpush.msra.mxu0 %v353
    %v355 = vand.u32 %v44, 4294901760
    %v356 = vsub.f32 %v44, %v355
    %v357 = vand.u32 %v356, 4294901760
    %358 = vmatpush.msra.mxu0 %v357
    %v359 = vand.u32 %v43, 4294901760
    %360 = vmatmul.f32.gmra.mxu0 %v359
    %v361 = vpop.f32.mrf.mxu0
    %v362 = vadd.f32 %v293, %v361
    %363 = vdwg.mxu0
    %v364 = vand.u32 %v59, 4294901760
    %365 = vmatpush.msra.mxu0 %v364
    %v366 = vand.u32 %v58, 4294901760
    %367 = vmatpush.msra.mxu0 %v366
    %v368 = vand.u32 %v57, 4294901760
    %369 = vmatpush.msra.mxu0 %v368
    %v370 = vand.u32 %v56, 4294901760
    %371 = vmatpush.msra.mxu0 %v370
    %v372 = vand.u32 %v55, 4294901760
    %373 = vmatpush.msra.mxu0 %v372
    %v374 = vand.u32 %v54, 4294901760
    %375 = vmatpush.msra.mxu0 %v374
    %v376 = vand.u32 %v53, 4294901760
    %377 = vmatpush.msra.mxu0 %v376
    %v378 = vand.u32 %v52, 4294901760
    %379 = vmatpush.msra.mxu0 %v378
    %v380 = vand.u32 %v51, 4294901760
    %381 = vmatpush.msra.mxu0 %v380
    %v382 = vand.u32 %v50, 4294901760
    %383 = vmatpush.msra.mxu0 %v382
    %v384 = vand.u32 %v49, 4294901760
    %385 = vmatpush.msra.mxu0 %v384
    %v386 = vand.u32 %v48, 4294901760
    %387 = vmatpush.msra.mxu0 %v386
    %v388 = vand.u32 %v47, 4294901760
    %389 = vmatpush.msra.mxu0 %v388
    %v390 = vand.u32 %v46, 4294901760
    %391 = vmatpush.msra.mxu0 %v390
    %v392 = vand.u32 %v45, 4294901760
    %393 = vmatpush.msra.mxu0 %v392
    %v394 = vand.u32 %v44, 4294901760
    %395 = vmatpush.msra.mxu0 %v394
    %v396 = vand.u32 %v43, 4294901760
    %397 = vmatmul.f32.gmra.mxu0 %v396
    %v398 = vpop.f32.mrf.mxu0
    %v399 = vadd.f32 %v362, %v398
    %400 = vdwg.mxu0
    %v401 = vrsqrt.pop %v399
    %v402 = vmul.f32 %v401, %v399
    %v403 = vmul.f32 %v402, %v401
    %v404 = vmul.f32 0.5, %v403
    %v405 = vsub.f32 1.5, %v404
    %v406 = vmul.f32 %v401, %v405
    %v407 = vmul.f32 %v399, %v406
    %vm408 = vcmp.eq.f32.partialorder %v399, inf
    %v409 = vsel %vm408, %v399, %v407
    %vm410 = vcmp.eq.f32.partialorder %v399, 0.0
    %v411 = vand.u32 %v399, 2147483648
    %v412 = vsel %vm410, %v411, %v409
    %v413 = vadd.f32 %v412, 1e-08
    %v414 = vrcp.pop %v413
    %v415 = vmul.f32 %v413, %v414
    %v416 = vsub.f32 1.0, %v415
    %v417 = vmul.f32 %v414, %v416
    %v418 = vadd.f32 %v414, %v417
    %vm419 = vweird.f32 %v413
    %vm420 = vweird.f32 %v414
    %vm421 = vmor %vm419, %vm420
    %v422 = vsel %vm421, %v414, %v418
    %v423 = vand.u32 2147483647, %v413
    %vm424 = vcmp.eq.f32.partialorder %v423, 8.507059e+37
    %v425 = vand.u32 %v413, 2147483648
    %v426 = vor.u32 1.1754944e-38, %v425
    %v427 = vsel %vm424, %v426, %v422
    %v428 = vmul.f32 1.0, %v427
    %v429 = vmul.f32 %v42, %v428
    %430 = vst [vmem:[#allocation7] sm:$0xf] %v429
    // Predicated region
    $region18: #{tpu_custom_call.1} parent=1 // pred_check
      _
    $region19: #{tpu_custom_call.1} parent=1 // pred_check_branch
      %432 = sbr.rel (0) target = $region21
    $region20: #{tpu_custom_call.1} parent=1 // pred_region
      %434 = vsyncadd [#allocation4], 0
      %s436 = sshll.u32 [#allocation7], 4
      %s437 = int_to_ptr.vmem [resolvable:$true] %s436
      %s438 = sshll.u32 %s2, 4
      %s439 = int_to_ptr.hbm [resolvable:$true] %s438
      %441 = dma.vmem_to_hbm [thread:$0]  %s437, 64, %s439, [#allocation4]
    $region21: #{tpu_custom_call.1} parent=1 // pred_fallthru
      _
    // Predicated region
    $region22: #{tpu_custom_call.1} parent=1 // pred_check
      _
    $region23: #{tpu_custom_call.1} parent=1 // pred_check_branch
      %443 = sbr.rel (0) target = $region25
    $region24: #{tpu_custom_call.1} parent=1 // pred_region
      %445 = dma.done [#allocation4], 64
    $region25: #{tpu_custom_call.1} parent=1 // pred_fallthru
      _
    %446 = vsyncpa [#allocation3], 1
    %447 = vsyncpa [#allocation6], 1
    %448 = vsyncpa [#allocation4], 1

</llo_original>
